<compile_context>
chip_gen: v5e
topology: v5e:2x2
jax: 0.10.0
libtpu: 0.0.40
codegen_flags: <defaults>
</compile_context>

<pallas_src>
import math

import numpy as np
import jax
import jax.numpy as jnp
from jax import lax
from jax.experimental import pallas as pl
from jax.experimental.pallas import tpu as pltpu


_ROWS_SUB = 8                              # rows handled per inner iteration (one sublane group)
_TIME_CHUNK = 512                          # lane chunk per inner iteration (multiple of 128)
_VMEM_BLOCK_BUDGET = 16 * 1024 * 1024      # target bytes for the double-buffered blocks
_VMEM_LIMIT = 48 * 1024 * 1024             # fits v7x 64 MiB physical; > v5e/v6e defaults


# -----------------------------------------------------------------------------
# Deterministic filter construction (same math as the torch kaiser_sinc_filter1d)
# -----------------------------------------------------------------------------
def kaiser_sinc_filter1d(cutoff, half_width, kernel_size):
    even = (kernel_size % 2 == 0)
    half_size = kernel_size // 2

    delta_f = 4.0 * half_width
    A = 2.285 * (half_size - 1) * math.pi * delta_f + 7.95
    if A > 50.0:
        beta = 0.1102 * (A - 8.7)
    elif A >= 21.0:
        beta = 0.5842 * (A - 21.0) ** 0.4 + 0.07886 * (A - 21.0)
    else:
        beta = 0.0
    window = np.kaiser(kernel_size, beta)

    if even:
        time = np.arange(-half_size, half_size) + 0.5
    else:
        time = np.arange(kernel_size) - half_size

    if cutoff == 0:
        filt = np.zeros_like(time)
    else:
        filt = 2.0 * cutoff * window * np.sinc(2.0 * cutoff * time)
        filt = filt / filt.sum()
    return filt.astype(np.float32)  # (kernel_size,)


def _round_up(x, m):
    return (x + m - 1) // m * m


def _pick_block_rows(rows_pad, T, stride):
    """Largest multiple-of-8 divisor of rows_pad whose blocks fit the VMEM budget."""
    # double-buffered f32 input block + `stride` double-buffered f32 output blocks
    per_row_bytes = 4 * T * 2 * (1 + stride)
    cap = _VMEM_BLOCK_BUDGET // max(per_row_bytes, 1)
    cap = max(_ROWS_SUB, (cap // _ROWS_SUB) * _ROWS_SUB)
    cap = min(cap, 512, rows_pad)
    # keep >= 2 grid steps when possible so both v7x TensorCores get work
    if rows_pad >= 2 * _ROWS_SUB:
        cap = min(cap, max(_ROWS_SUB, (rows_pad // 2) // _ROWS_SUB * _ROWS_SUB))
    br = cap
    while rows_pad % br:
        br -= _ROWS_SUB
    return br


# -----------------------------------------------------------------------------
# Pallas kernel: fused pad + polyphase depthwise transposed conv (+ ratio scale)
# -----------------------------------------------------------------------------
def _make_upsample_kernel(*, T, pad, stride, taps, bases, rhos, w_scaled,
                          block_rows, time_chunk):
    loff = (-pad) % 128            # left slack so staged copies are lane-aligned
    sw = loff + 2 * pad + T        # scratch width (zero-padded strip)
    n_strips = block_rows // _ROWS_SUB
    n_full = T // time_chunk
    tail = T - n_full * time_chunk
    # distinct shifted input windows needed per chunk (shared across phases)
    offsets = sorted({bases[r] - j for r in range(stride) for j in range(taps)})
    hint_ok = (time_chunk % 128 == 0)

    def _hint(v):
        return pl.multiple_of(v, time_chunk) if hint_ok else v

    def kernel(x_ref, *rest):
        out_refs = rest[:stride]
        xs = rest[stride]          # VMEM scratch: one zero-padded 8-row strip

        def emit(r0, t0, width):
            # load each distinct shifted window once, reuse across the `stride` phases
            win = {d: xs[:, pl.ds(t0 + d + loff, width)] for d in offsets}
            for r in range(stride):
                acc = win[bases[r]] * w_scaled[rhos[r]]
                for j in range(1, taps):
                    acc = acc + win[bases[r] - j] * w_scaled[rhos[r] + stride * j]
                out_refs[r][pl.ds(r0, _ROWS_SUB), pl.ds(t0, width)] = (
                    acc.astype(out_refs[r].dtype))

        def row_strip(rs, carry):
            r0 = pl.multiple_of(rs * _ROWS_SUB, _ROWS_SUB)

            # --- stage the zero-padded strip into VMEM scratch (fused ConstantPad1d)
            if pad > 0:
                xs[:, loff:loff + pad] = jnp.zeros((_ROWS_SUB, pad), jnp.float32)
                xs[:, loff + pad + T:sw] = jnp.zeros((_ROWS_SUB, pad), jnp.float32)

            def copy_chunk(c, carry2):
                t0 = _hint(c * time_chunk)
                xs[:, pl.ds(loff + pad + t0, time_chunk)] = (
                    x_ref[pl.ds(r0, _ROWS_SUB), pl.ds(t0, time_chunk)])
                return carry2

            lax.fori_loop(0, n_full, copy_chunk, 0)
            if tail:
                t0 = n_full * time_chunk
                xs[:, pl.ds(loff + pad + t0, tail)] = (
                    x_ref[pl.ds(r0, _ROWS_SUB), pl.ds(t0, tail)])

            # --- polyphase accumulation, time-chunked (keeps the working set small)
            def comp_chunk(c, carry2):
                t0 = _hint(c * time_chunk)
                emit(r0, t0, time_chunk)
                return carry2

            lax.fori_loop(0, n_full, comp_chunk, 0)
            if tail:
                emit(r0, n_full * time_chunk, tail)
            return carry

        lax.fori_loop(0, n_strips, row_strip, 0)

    return kernel


class UpSample1dExportPallas:
    """JAX/Pallas re-implementation of UpSample1d_Export.forward (x: (B, C, T) f32)."""

    def __init__(self, in_channels, ratio=2, kernel_size=None):
        self.in_channels = in_channels
        self.ratio = ratio
        self.kernel_size = int(6 * ratio // 2) * 2 if kernel_size is None else kernel_size
        self.stride = ratio
        self.pad = self.kernel_size // ratio - 1
        self.pad_left = self.pad * self.stride + (self.kernel_size - self.stride) // 2
        self.pad_right = self.pad * self.stride + (self.kernel_size - self.stride + 1) // 2
        assert self.kernel_size % self.stride == 0
        self.taps = self.kernel_size // self.stride

        filt = kaiser_sinc_filter1d(0.5 / ratio, 0.6 / ratio, self.kernel_size)
        self.filter = jnp.asarray(filt, jnp.float32)   # kept only for reference checking
        # Bake `ratio * filter` taps as python float constants closed over by the kernel.
        self._w_scaled = tuple(float(self.ratio) * float(v) for v in filt)

        # Polyphase decomposition of (ConstantPad1d -> ConvTranspose1d -> crop):
        #   out[stride*q + r] = ratio * sum_j filt[rho_r + stride*j] * xpad[base_r + q - j]
        self.rhos, self.bases = [], []
        for r in range(self.stride):
            n0 = self.pad_left + r
            rho = n0 % self.stride
            self.rhos.append(rho)
            self.bases.append((n0 - rho) // self.stride)
        # For the kaiser-sinc configurations every tap stays inside the zero-padded window,
        # so no per-tap boundary masking is needed inside the kernel.
        for r in range(self.stride):
            assert self.bases[r] - (self.taps - 1) >= 0
            assert self.bases[r] <= 2 * self.pad

    def __call__(self, x):
        B, C, T = x.shape
        assert C == self.in_channels
        stride = self.stride
        rows = B * C
        rows_pad = _round_up(rows, _ROWS_SUB)
        block_rows = _pick_block_rows(rows_pad, T, stride)
        time_chunk = min(_TIME_CHUNK, T)

        x2 = x.reshape(rows, T).astype(jnp.float32)
        if rows_pad != rows:
            x2 = jnp.pad(x2, ((0, rows_pad - rows), (0, 0)))

        kernel = _make_upsample_kernel(
            T=T, pad=self.pad, stride=stride, taps=self.taps,
            bases=tuple(self.bases), rhos=tuple(self.rhos),
            w_scaled=self._w_scaled, block_rows=block_rows, time_chunk=time_chunk)

        loff = (-self.pad) % 128
        scratch_w = loff + 2 * self.pad + T

        outs = pl.pallas_call(
            kernel,
            out_shape=tuple(jax.ShapeDtypeStruct((rows_pad, T), jnp.float32)
                            for _ in range(stride)),
            grid=(rows_pad // block_rows,),
            in_specs=[pl.BlockSpec((block_rows, T), lambda i: (i, 0))],
            out_specs=tuple(pl.BlockSpec((block_rows, T), lambda i: (i, 0))
                            for _ in range(stride)),
            scratch_shapes=[pltpu.VMEM((_ROWS_SUB, scratch_w), jnp.float32)],
            compiler_params=pltpu.CompilerParams(
                dimension_semantics=("parallel",),
                vmem_limit_bytes=_VMEM_LIMIT),
        )(x2)

        # Interleave the polyphase outputs: y[..., stride*q + r] = phase_r[..., q].
        # Single fused XLA pass (slice + stack + reshape) under jit.
        # TODO(synk): fuse this interleave into the kernel once a reliable lane-level
        # f32 interleave / stride-`ratio` store primitive is available in Mosaic.
        y = jnp.stack([o[:rows] for o in outs], axis=-1)      # (rows, T, stride)
        return y.reshape(B, C, stride * T)


# -----------------------------------------------------------------------------
# Pure numpy reference of the exact PyTorch forward (pad -> conv_transpose -> crop)
# -----------------------------------------------------------------------------
def _reference_numpy(x, filt, ratio, ks, stride, pad, pad_left, pad_right):
    B, C, T = x.shape
    xp = np.pad(x, ((0, 0), (0, 0), (pad, pad)))
    Lp = xp.shape[-1]
    ylen = (Lp - 1) * stride + ks
    y = np.zeros((B, C, ylen), np.float64)
    for m in range(Lp):
        for k in range(ks):
            y[:, :, m * stride + k] += xp[:, :, m] * filt[k]
    y = ratio * y
    return y[:, :, pad_left: ylen - pad_right].astype(np.float32)


def _check(B, C, T, ratio, seed):
    key = jax.random.PRNGKey(seed)
    x = jax.random.normal(key, (B, C, T), dtype=jnp.float32)
    mod = UpSample1dExportPallas(in_channels=C, ratio=ratio)
    y = jax.block_until_ready(jax.jit(mod.__call__)(x))
    y_ref = _reference_numpy(np.asarray(x), np.asarray(mod.filter), mod.ratio,
                             mod.kernel_size, mod.stride, mod.pad,
                             mod.pad_left, mod.pad_right)
    assert y.shape == (B, C, ratio * T), y.shape
    np.testing.assert_allclose(np.asarray(y), y_ref, rtol=1e-5, atol=1e-5)


if __name__ == "__main__":
    # primary small config (matches the module's expected (B, C, T) layout)
    _check(B=2, C=4, T=16, ratio=2, seed=0)
    # exercises multi-row-block grid, the 512-lane chunk loop + tail path
    _check(B=2, C=16, T=700, ratio=2, seed=0)
    # non-default ratio: 3 polyphase outputs, 18 taps
    _check(B=1, C=8, T=40, ratio=3, seed=0)
    print("KERNEL_OK")
</pallas_src>

<mosaic_0001>
module attributes {stable_mosaic.version = 11 : i64} {
  func.func @kernel(%arg0: i32, %arg1: memref<8x16xf32, #tpu.memory_space<vmem>>, %arg2: memref<8x16xf32, #tpu.memory_space<vmem>>, %arg3: memref<8x16xf32, #tpu.memory_space<vmem>>, %arg4: memref<8x149xf32, #tpu.memory_space<vmem>>) attributes {dimension_semantics = [#tpu.dimension_semantics<parallel>], iteration_bounds = array<i64: 1>, scalar_prefetch = 0 : i64, scratch_operands = 1 : i64, tpu.core_type = #tpu.core_type<tc>, window_params = [{transform_indices = @transform_0, window_bounds = array<i64: 8, 16>}, {transform_indices = @transform_1, window_bounds = array<i64: 8, 16>}, {transform_indices = @transform_2, window_bounds = array<i64: 8, 16>}]} {
    %c0_i32 = arith.constant 0 : i32
    %c8_i32 = arith.constant 8 : i32
    %0 = arith.muli %c0_i32, %c8_i32 : i32
    %1 = tpu.assume_multiple %0, 8 : i32
    %cst = arith.constant 0.000000e+00 : f32
    %2 = vector.broadcast %cst : f32 to vector<8x5xf32>
    %c0 = arith.constant 0 : index
    %c123 = arith.constant 123 : index
    %3 = vector.load %arg4[%c0, %c123] : memref<8x149xf32, #tpu.memory_space<vmem>>, vector<8x5xf32>
    tpu.vector_store %arg4[%c0, %c123], %2 {strides = array<i32>} : memref<8x149xf32, #tpu.memory_space<vmem>>, vector<8x5xf32>,
    %cst_0 = arith.constant 0.000000e+00 : f32
    %4 = vector.broadcast %cst_0 : f32 to vector<8x5xf32>
    %c0_1 = arith.constant 0 : index
    %c144 = arith.constant 144 : index
    %5 = vector.load %arg4[%c0_1, %c144] : memref<8x149xf32, #tpu.memory_space<vmem>>, vector<8x5xf32>
    tpu.vector_store %arg4[%c0_1, %c144], %4 {strides = array<i32>} : memref<8x149xf32, #tpu.memory_space<vmem>>, vector<8x5xf32>,
    %c0_i32_2 = arith.constant 0 : i32
    %c16_i32 = arith.constant 16 : i32
    %6 = arith.muli %c0_i32_2, %c16_i32 : i32
    %7 = arith.index_cast %1 : i32 to index
    %8 = arith.index_cast %6 : i32 to index
    %9 = vector.load %arg1[%7, %8] : memref<8x16xf32, #tpu.memory_space<vmem>>, vector<8x16xf32>
    %c128_i32 = arith.constant 128 : i32
    %10 = arith.addi %c128_i32, %6 : i32
    %c0_3 = arith.constant 0 : index
    %11 = arith.index_cast %10 : i32 to index
    %12 = vector.load %arg4[%c0_3, %11] : memref<8x149xf32, #tpu.memory_space<vmem>>, vector<8x16xf32>
    tpu.vector_store %arg4[%c0_3, %11], %9 {strides = array<i32>} : memref<8x149xf32, #tpu.memory_space<vmem>>, vector<8x16xf32>,
    %c1_i32 = arith.constant 1 : i32
    %c0_i32_4 = arith.constant 0 : i32
    %c16_i32_5 = arith.constant 16 : i32
    %13 = arith.muli %c0_i32_4, %c16_i32_5 : i32
    %c2_i32 = arith.constant 2 : i32
    %14 = arith.addi %13, %c2_i32 : i32
    %c123_i32 = arith.constant 123 : i32
    %15 = arith.addi %14, %c123_i32 : i32
    %c0_6 = arith.constant 0 : index
    %16 = arith.index_cast %15 : i32 to index
    %17 = vector.load %arg4[%c0_6, %16] : memref<8x149xf32, #tpu.memory_space<vmem>>, vector<8x16xf32>
    %c3_i32 = arith.constant 3 : i32
    %18 = arith.addi %13, %c3_i32 : i32
    %c123_i32_7 = arith.constant 123 : i32
    %19 = arith.addi %18, %c123_i32_7 : i32
    %c0_8 = arith.constant 0 : index
    %20 = arith.index_cast %19 : i32 to index
    %21 = vector.load %arg4[%c0_8, %20] : memref<8x149xf32, #tpu.memory_space<vmem>>, vector<8x16xf32>
    %c4_i32 = arith.constant 4 : i32
    %22 = arith.addi %13, %c4_i32 : i32
    %c123_i32_9 = arith.constant 123 : i32
    %23 = arith.addi %22, %c123_i32_9 : i32
    %c0_10 = arith.constant 0 : index
    %24 = arith.index_cast %23 : i32 to index
    %25 = vector.load %arg4[%c0_10, %24] : memref<8x149xf32, #tpu.memory_space<vmem>>, vector<8x16xf32>
    %c5_i32 = arith.constant 5 : i32
    %26 = arith.addi %13, %c5_i32 : i32
    %c123_i32_11 = arith.constant 123 : i32
    %27 = arith.addi %26, %c123_i32_11 : i32
    %c0_12 = arith.constant 0 : index
    %28 = arith.index_cast %27 : i32 to index
    %29 = vector.load %arg4[%c0_12, %28] : memref<8x149xf32, #tpu.memory_space<vmem>>, vector<8x16xf32>
    %c6_i32 = arith.constant 6 : i32
    %30 = arith.addi %13, %c6_i32 : i32
    %c123_i32_13 = arith.constant 123 : i32
    %31 = arith.addi %30, %c123_i32_13 : i32
    %c0_14 = arith.constant 0 : index
    %32 = arith.index_cast %31 : i32 to index
    %33 = vector.load %arg4[%c0_14, %32] : memref<8x149xf32, #tpu.memory_space<vmem>>, vector<8x16xf32>
    %c7_i32 = arith.constant 7 : i32
    %34 = arith.addi %13, %c7_i32 : i32
    %c123_i32_15 = arith.constant 123 : i32
    %35 = arith.addi %34, %c123_i32_15 : i32
    %c0_16 = arith.constant 0 : index
    %36 = arith.index_cast %35 : i32 to index
    %37 = vector.load %arg4[%c0_16, %36] : memref<8x149xf32, #tpu.memory_space<vmem>>, vector<8x16xf32>
    %c8_i32_17 = arith.constant 8 : i32
    %38 = arith.addi %13, %c8_i32_17 : i32
    %c123_i32_18 = arith.constant 123 : i32
    %39 = arith.addi %38, %c123_i32_18 : i32
    %c0_19 = arith.constant 0 : index
    %40 = arith.index_cast %39 : i32 to index
    %41 = vector.load %arg4[%c0_19, %40] : memref<8x149xf32, #tpu.memory_space<vmem>>, vector<8x16xf32>
    %cst_20 = arith.constant 0.0187789276 : f32
    %42 = vector.broadcast %cst_20 : f32 to vector<8x16xf32>
    %43 = arith.mulf %37, %42 : vector<8x16xf32>
    %cst_21 = arith.constant -0.115314752 : f32
    %44 = vector.broadcast %cst_21 : f32 to vector<8x16xf32>
    %45 = arith.mulf %33, %44 : vector<8x16xf32>
    %46 = arith.addf %43, %45 : vector<8x16xf32>
    %cst_22 = arith.constant 0.886419594 : f32
    %47 = vector.broadcast %cst_22 : f32 to vector<8x16xf32>
    %48 = arith.mulf %29, %47 : vector<8x16xf32>
    %49 = arith.addf %46, %48 : vector<8x16xf32>
    %cst_23 = arith.constant 0.257145226 : f32
    %50 = vector.broadcast %cst_23 : f32 to vector<8x16xf32>
    %51 = arith.mulf %25, %50 : vector<8x16xf32>
    %52 = arith.addf %49, %51 : vector<8x16xf32>
    %cst_24 = arith.constant -0.0510869287 : f32
    %53 = vector.broadcast %cst_24 : f32 to vector<8x16xf32>
    %54 = arith.mulf %21, %53 : vector<8x16xf32>
    %55 = arith.addf %52, %54 : vector<8x16xf32>
    %cst_25 = arith.constant 0.00405793311 : f32
    %56 = vector.broadcast %cst_25 : f32 to vector<8x16xf32>
    %57 = arith.mulf %17, %56 : vector<8x16xf32>
    %58 = arith.addf %55, %57 : vector<8x16xf32>
    %59 = arith.index_cast %1 : i32 to index
    %60 = arith.index_cast %13 : i32 to index
    %61 = vector.load %arg2[%59, %60] : memref<8x16xf32, #tpu.memory_space<vmem>>, vector<8x16xf32>
    tpu.vector_store %arg2[%59, %60], %58 {strides = array<i32>} : memref<8x16xf32, #tpu.memory_space<vmem>>, vector<8x16xf32>,
    %cst_26 = arith.constant 0.00405793311 : f32
    %62 = vector.broadcast %cst_26 : f32 to vector<8x16xf32>
    %63 = arith.mulf %41, %62 : vector<8x16xf32>
    %cst_27 = arith.constant -0.0510869287 : f32
    %64 = vector.broadcast %cst_27 : f32 to vector<8x16xf32>
    %65 = arith.mulf %37, %64 : vector<8x16xf32>
    %66 = arith.addf %63, %65 : vector<8x16xf32>
    %cst_28 = arith.constant 0.257145226 : f32
    %67 = vector.broadcast %cst_28 : f32 to vector<8x16xf32>
    %68 = arith.mulf %33, %67 : vector<8x16xf32>
    %69 = arith.addf %66, %68 : vector<8x16xf32>
    %cst_29 = arith.constant 0.886419594 : f32
    %70 = vector.broadcast %cst_29 : f32 to vector<8x16xf32>
    %71 = arith.mulf %29, %70 : vector<8x16xf32>
    %72 = arith.addf %69, %71 : vector<8x16xf32>
    %cst_30 = arith.constant -0.115314752 : f32
    %73 = vector.broadcast %cst_30 : f32 to vector<8x16xf32>
    %74 = arith.mulf %25, %73 : vector<8x16xf32>
    %75 = arith.addf %72, %74 : vector<8x16xf32>
    %cst_31 = arith.constant 0.0187789276 : f32
    %76 = vector.broadcast %cst_31 : f32 to vector<8x16xf32>
    %77 = arith.mulf %21, %76 : vector<8x16xf32>
    %78 = arith.addf %75, %77 : vector<8x16xf32>
    %79 = arith.index_cast %1 : i32 to index
    %80 = arith.index_cast %13 : i32 to index
    %81 = vector.load %arg3[%79, %80] : memref<8x16xf32, #tpu.memory_space<vmem>>, vector<8x16xf32>
    tpu.vector_store %arg3[%79, %80], %78 {strides = array<i32>} : memref<8x16xf32, #tpu.memory_space<vmem>>, vector<8x16xf32>,
    %c1_i32_32 = arith.constant 1 : i32
    %c1_i32_33 = arith.constant 1 : i32
    return
  }
  func.func @transform_0(%arg0: i32) -> (i32, i32) {
    %c0_i32 = arith.constant 0 : i32
    %c0_i32_0 = arith.constant 0 : i32
    return %arg0, %c0_i32 : i32, i32
  }
  func.func @transform_1(%arg0: i32) -> (i32, i32) {
    %c0_i32 = arith.constant 0 : i32
    %c0_i32_0 = arith.constant 0 : i32
    return %arg0, %c0_i32 : i32, i32
  }
  func.func @transform_2(%arg0: i32) -> (i32, i32) {
    %c0_i32 = arith.constant 0 : i32
    %c0_i32_0 = arith.constant 0 : i32
    return %arg0, %c0_i32 : i32, i32
  }
}

</mosaic_0001>

<llo_original>
// kernel: a_call__.1
$region0: #{a_call__.1}
  #allocation0 [shape = 'u32[]', space=smem, size = 0x4, offset = 0x4, fixed_abs, tag = 'smem constant byte address 0x4 - core index']
  #allocation1 [shape = 'u32[72,128]{1,0:T(1,128)}', space=vmem, size = 0x9000, scoped, tag = 'internal scratch']
  #allocation2 [shape = 'f32[8,149]{1,0:T(8,128)}', space=vmem, size = 0x2000, scoped, tag = 'scratch operand']
  %s0 = inlined_call_operand.hbm [shape: f32[8,16], index: 0, kind: input, shape index: {}]
  %s1 = inlined_call_operand.vmem [shape: f32[8,16], index: 1, kind: output, shape index: {0}]
  %s2 = inlined_call_operand.vmem [shape: f32[8,16], index: 2, kind: output, shape index: {1}]
  %3 = xla_tuple %s1, %s2
  %s4 = sld [smem:[#allocation0]]
  $region26: #{a_call__.1} parent=0
    _
  %s6 = ssub.s32 1, %s4
  %s7 = scalar_select 0, %s6, %s4
  $region1: #{a_call__.1} parent=0
    #allocation3 [shape = 'u8[4096]{0}', space=vmem, size = 0x1000, scoped, tag = 'input window, operand 0, single buffered']
    #allocation4 [shape = 's32[1]{0}', space=sflag, size = 0x4, scoped, tag = 'scoped memory for a_call__.1']
    %8 = vsyncpa [#allocation4], 0
    // Predicated region
    $region2: #{a_call__.1} parent=1 // pred_check
      _
    $region3: #{a_call__.1} parent=1 // pred_check_branch
      %10 = sbr.rel (0) target = $region5
    $region4: #{a_call__.1} parent=1 // pred_region
      %12 = vsyncadd [#allocation4], 0
      %s14 = sshll.u32 %s0, 4
      %s15 = int_to_ptr.hbm [resolvable:$true] %s14
      %s16 = sshll.u32 [#allocation3], 4
      %s17 = int_to_ptr.vmem [resolvable:$true] %s16
      %19 = dma.hbm_to_vmem [thread:$0]  %s15, 128, %s17, [#allocation4]
    $region5: #{a_call__.1} parent=1 // pred_fallthru
      _
    // Predicated region
    $region6: #{a_call__.1} parent=1 // pred_check
      _
    $region7: #{a_call__.1} parent=1 // pred_check_branch
      %21 = sbr.rel (0) target = $region9
    $region8: #{a_call__.1} parent=1 // pred_region
      %23 = dma.done [#allocation4], 128
    $region9: #{a_call__.1} parent=1 // pred_fallthru
      _
    %vm24 = vcmask 1048536
    %25 = vst.msk [vmem:[#allocation2] sm:$0xff] %vm24, 0.0
    %vm26 = vcmask 171136
    %27 = vst.msk [vmem:[#allocation2 + $0x8] sm:$0xff] %vm26, 0.0
    %v28 = vld [vmem:[#allocation3] sm:$0xff]
    %vm29 = vcmask 130048
    %30 = vst.msk [vmem:[#allocation2 + $0x8] sm:$0xff] %vm29, %v28
    %v31 = vld [vmem:[#allocation2] sm:$0xff]
    %v32 = vld [vmem:[#allocation2 + $0x8] sm:$0xff]
    %v33 = vmul.f32 %v32, 0.018778928
    %v34 = vmul.f32 %v32, -0.11531475
    %36 = vrot.lane.b32.xlu0 %v34, 1
    %v37 = vpop.permute.xlu0 %36
    %v39 = vadd.f32 %v33, %v37
    %v40 = vmul.f32 %v32, 0.8864196
    %42 = vrot.lane.b32.xlu0 %v40, 2
    %v43 = vpop.permute.xlu0 %42
    %v45 = vadd.f32 %v39, %v43
    %v46 = vmul.f32 %v31, 0.25714523
    %v47 = vmul.f32 %v32, 0.25714523
    %50 = vrot.lane.b32.xlu0 %v46, 3
    %v51 = vpop.permute.xlu0 %50
    %52 = vrot.lane.b32.xlu0 %v47, 3
    %v53 = vpop.permute.xlu0 %52
    %vm54 = vcmask 23552
    %v55 = vsel %vm54, %v51, %v53
    %v57 = vadd.f32 %v45, %v55
    %v58 = vmul.f32 %v31, -0.05108693
    %v59 = vmul.f32 %v32, -0.05108693
    %62 = vrot.lane.b32.xlu0 %v58, 4
    %v63 = vpop.permute.xlu0 %62
    %64 = vrot.lane.b32.xlu0 %v59, 4
    %v65 = vpop.permute.xlu0 %64
    %vm66 = vcmask 31744
    %v67 = vsel %vm66, %v63, %v65
    %v69 = vadd.f32 %v57, %v67
    %v70 = vmul.f32 %v31, 0.004057933
    %v71 = vmul.f32 %v32, 0.004057933
    %74 = vrot.lane.b32.xlu0 %v70, 5
    %v75 = vpop.permute.xlu0 %74
    %76 = vrot.lane.b32.xlu0 %v71, 5
    %v77 = vpop.permute.xlu0 %76
    %vm78 = vcmask 39936
    %v79 = vsel %vm78, %v75, %v77
    %v81 = vadd.f32 %v69, %v79
    %83 = vrot.lane.b32.xlu0 %v81, 126
    %v84 = vpop.permute.xlu0 %83
    %86 = vst.msk [vmem:[%s1] sm:$0xff] %vm29, %v84
    %87 = vrot.lane.b32.xlu0 %v59, 1
    %v88 = vpop.permute.xlu0 %87
    %v90 = vadd.f32 %v71, %v88
    %91 = vrot.lane.b32.xlu0 %v47, 2
    %v92 = vpop.permute.xlu0 %91
    %v94 = vadd.f32 %v90, %v92
    %95 = vrot.lane.b32.xlu0 %v40, 3
    %v96 = vpop.permute.xlu0 %95
    %v98 = vadd.f32 %v94, %v96
    %v99 = vmul.f32 %v31, -0.11531475
    %101 = vrot.lane.b32.xlu0 %v99, 4
    %v102 = vpop.permute.xlu0 %101
    %103 = vrot.lane.b32.xlu0 %v34, 4
    %v104 = vpop.permute.xlu0 %103
    %v105 = vsel %vm66, %v102, %v104
    %v107 = vadd.f32 %v98, %v105
    %v108 = vmul.f32 %v31, 0.018778928
    %111 = vrot.lane.b32.xlu0 %v108, 5
    %v112 = vpop.permute.xlu0 %111
    %113 = vrot.lane.b32.xlu0 %v33, 5
    %v114 = vpop.permute.xlu0 %113
    %v115 = vsel %vm78, %v112, %v114
    %v117 = vadd.f32 %v107, %v115
    %119 = vrot.lane.b32.xlu0 %v117, 125
    %v120 = vpop.permute.xlu0 %119
    %122 = vst.msk [vmem:[%s2] sm:$0xff] %vm29, %v120
    // Predicated region
    $region10: #{a_call__.1} parent=1 // pred_check
      _
    $region11: #{a_call__.1} parent=1 // pred_check_branch
      %124 = sbr.rel (0) target = $region13
    $region12: #{a_call__.1} parent=1 // pred_region
      _
    $region13: #{a_call__.1} parent=1 // pred_fallthru
      _
    // Predicated region
    $region14: #{a_call__.1} parent=1 // pred_check
      _
    $region15: #{a_call__.1} parent=1 // pred_check_branch
      %126 = sbr.rel (0) target = $region17
    $region16: #{a_call__.1} parent=1 // pred_region
      _
    $region17: #{a_call__.1} parent=1 // pred_fallthru
      _
    // Predicated region
    $region18: #{a_call__.1} parent=1 // pred_check
      _
    $region19: #{a_call__.1} parent=1 // pred_check_branch
      %128 = sbr.rel (0) target = $region21
    $region20: #{a_call__.1} parent=1 // pred_region
      _
    $region21: #{a_call__.1} parent=1 // pred_fallthru
      _
    // Predicated region
    $region22: #{a_call__.1} parent=1 // pred_check
      _
    $region23: #{a_call__.1} parent=1 // pred_check_branch
      %130 = sbr.rel (0) target = $region25
    $region24: #{a_call__.1} parent=1 // pred_region
      _
    $region25: #{a_call__.1} parent=1 // pred_fallthru
      _
    %131 = vsyncpa [#allocation4], 1

</llo_original>
